<compile_context>
chip_gen: v5e
topology: v5e:2x2
jax: 0.10.0
libtpu: 0.0.40
codegen_flags: <defaults>
</compile_context>

<pallas_src>
import jax
import jax.numpy as jnp
import numpy as np
from jax import lax
from jax.experimental import pallas as pl
from jax.experimental.pallas import tpu as pltpu

EPS = 1e-5
INV_SQRT2 = 0.7071067811865476


def make_ffblock_kernel(H, W, Cpad, b_blk):
    P = H * W
    Np = b_blk * P
    inv_p = 1.0 / P
    # tap k = u*3 + v, spatial offset (sy, sx) = (u-1, v-1), flat lane offset s = sy*W + sx
    tap_shifts = [(u - 1) * W + (v - 1) for u in range(3) for v in range(3)]

    def kernel(mask_ref, x_ref, w_ref, ada_ref, out_ref):
        x = x_ref[...].astype(jnp.float32)                      # (Cpad, Np)  lane-dense
        mask = mask_ref[...].astype(jnp.float32)                # (9*Cpad, Np) tap-validity 0/1
        w1 = w_ref[0:Cpad, :].astype(jnp.float32)               # (Cpad, 9*Cpad)
        w2 = w_ref[Cpad:2 * Cpad, :].astype(jnp.float32)
        g1 = ada_ref[0:Cpad, :].astype(jnp.float32)             # (Cpad, b_blk) per-image params
        be1 = ada_ref[Cpad:2 * Cpad, :].astype(jnp.float32)
        g2 = ada_ref[2 * Cpad:3 * Cpad, :].astype(jnp.float32)
        be2 = ada_ref[3 * Cpad:4 * Cpad, :].astype(jnp.float32)

        # ---- per-image (lane-segment) reduction / broadcast helpers -----------------
        if b_blk > 1:
            # 0/1 indicator matrices built in-register (no int division: range compares only);
            # segmented sums and broadcast-back both run on the otherwise-idle MXU.
            l_nb = lax.broadcasted_iota(jnp.int32, (Np, b_blk), 0)
            lo_nb = lax.broadcasted_iota(jnp.int32, (Np, b_blk), 1) * P
            seg_nb = ((l_nb >= lo_nb) & (l_nb < lo_nb + P)).astype(jnp.float32)   # (Np, b_blk)
            l_bn = lax.broadcasted_iota(jnp.int32, (b_blk, Np), 1)
            lo_bn = lax.broadcasted_iota(jnp.int32, (b_blk, Np), 0) * P
            seg_bn = ((l_bn >= lo_bn) & (l_bn < lo_bn + P)).astype(jnp.float32)   # (b_blk, Np)

            def seg_sum(a):                                      # (Cpad, Np) -> (Cpad, b_blk)
                return jnp.dot(a, seg_nb, preferred_element_type=jnp.float32)

            def seg_bcast(a):                                    # (Cpad, b_blk) -> (Cpad, Np)
                return jnp.dot(a, seg_bn, preferred_element_type=jnp.float32)
        else:
            def seg_sum(a):                                      # single image: plain lane reduce
                return jnp.sum(a, axis=1, keepdims=True)

            def seg_bcast(a):                                    # (Cpad, 1) broadcasts natively
                return a

        # ---- fused-tap conv3x3: one matmul, K = 9*Cpad, N = b_blk*P ------------------
        def conv3x3(a, w):
            parts = [a if s == 0 else pltpu.roll(a, shift=(-s) % Np, axis=1)
                     for s in tap_shifts]                        # 9 x (Cpad, Np), XLU rotates
            patch = jnp.concatenate(parts, axis=0) * mask        # (9*Cpad, Np), one mask multiply
            return jnp.dot(w, patch, preferred_element_type=jnp.float32)   # (Cpad, Np)

        # ---- AdaIN with fused affine: y*s + t ----------------------------------------
        def adain(y, g, be):
            sum_y = seg_sum(y)                                   # (Cpad, b_blk)
            sum_yy = seg_sum(y * y)
            mean = sum_y * inv_p
            var = jnp.maximum(sum_yy * inv_p - mean * mean, 0.0)
            s = g * lax.rsqrt(var + EPS)
            t = be - mean * s
            return y * seg_bcast(s) + seg_bcast(t)

        # layer1: conv -> AdaIN -> exact (erf) GELU
        y1 = adain(conv3x3(x, w1), g1, be1)
        y1 = 0.5 * y1 * (1.0 + lax.erf(y1 * INV_SQRT2))
        # layer2: conv -> AdaIN
        y2 = adain(conv3x3(y1, w2), g2, be2)
        # residual add, lane-dense store (padded channels are 0 + 0)
        out_ref[...] = (y2 + x).astype(out_ref.dtype)

    return kernel


def _tap_mask_stack(H, W, Cpad, b_blk):
    """(9*Cpad, b_blk*H*W) 0/1 masks, row r belongs to tap k = r // Cpad."""
    P = H * W
    ii, jj = np.meshgrid(np.arange(H), np.arange(W), indexing="ij")
    rows = []
    for u in range(3):
        for v in range(3):
            sy, sx = u - 1, v - 1
            ok = ((ii + sy >= 0) & (ii + sy < H) & (jj + sx >= 0) & (jj + sx < W))
            rows.append(np.broadcast_to(ok.reshape(1, P), (Cpad, P)))
    m = np.concatenate(rows, axis=0).astype(np.float32)          # (9*Cpad, P)
    return jnp.asarray(np.tile(m, (1, b_blk)))                   # (9*Cpad, b_blk*P)


def _to_kernel_weight(w_oihw, Cpad):
    """(Cout, Cin, 3, 3) -> (Cpad, 9*Cpad); column index = k*Cpad + cin, k = kh*3 + kw."""
    Cout, Cin, _, _ = w_oihw.shape
    w = jnp.transpose(w_oihw, (0, 2, 3, 1)).reshape(Cout, 9, Cin)
    w = jnp.pad(w, ((0, Cpad - Cout), (0, 0), (0, Cpad - Cin)))
    return w.reshape(Cpad, 9 * Cpad).astype(jnp.float32)


def _pack_adain(g1, be1, g2, be2, num_steps, b_blk, Cpad):
    """Per-image AdaIN params -> single (num_steps*4*Cpad, b_blk) array (one DMA per step)."""
    N, C = g1.shape

    def padc(a):
        return jnp.pad(a.astype(jnp.float32), ((0, 0), (0, Cpad - C)))

    p = jnp.concatenate([padc(g1), padc(be1), padc(g2), padc(be2)], axis=1)   # (N, 4*Cpad)
    p = p.reshape(num_steps, b_blk, 4 * Cpad)
    return jnp.transpose(p, (0, 2, 1)).reshape(num_steps * 4 * Cpad, b_blk)


def ffblock_forward(x_nchw, w1_oihw, w2_oihw, g1, be1, g2, be2, b_blk=None):
    """Forward pass of FFBlock. Conv biases are intentionally not taken: a per-channel constant
    added before instance norm is exactly cancelled by the mean subtraction."""
    N, C, H, W = x_nchw.shape
    P = H * W
    Cpad = max(8, -(-C // 8) * 8)                     # round channels up to 8 sublanes
    if b_blk is None:
        # 2 grid steps when possible (feeds both v7x TensorCores), otherwise the whole batch.
        b_blk = N // 2 if (N % 2 == 0 and N >= 2) else N
    assert N % b_blk == 0, "b_blk must divide the batch"
    num_steps = N // b_blk
    Np = b_blk * P

    # lane-flattened, channel-padded activations: (Cpad, N*P), image b occupies lanes [b*P,(b+1)*P)
    x_pad = jnp.pad(x_nchw.reshape(N, C, P).astype(jnp.float32),
                    ((0, 0), (0, Cpad - C), (0, 0)))
    x_flat = jnp.transpose(x_pad, (1, 0, 2)).reshape(Cpad, N * P)

    w_packed = jnp.concatenate([_to_kernel_weight(w1_oihw, Cpad),
                                _to_kernel_weight(w2_oihw, Cpad)], axis=0)    # (2*Cpad, 9*Cpad)
    ada_packed = _pack_adain(g1, be1, g2, be2, num_steps, b_blk, Cpad)        # (steps*4*Cpad, b_blk)
    mask = _tap_mask_stack(H, W, Cpad, b_blk)                                 # (9*Cpad, Np)

    out_flat = pl.pallas_call(
        make_ffblock_kernel(H, W, Cpad, b_blk),
        out_shape=jax.ShapeDtypeStruct((Cpad, N * P), jnp.float32),
        grid_spec=pltpu.PrefetchScalarGridSpec(
            num_scalar_prefetch=0,
            grid=(num_steps,),
            in_specs=[
                pl.BlockSpec((9 * Cpad, Np), lambda n: (0, 0)),        # tap masks (constant)
                pl.BlockSpec((Cpad, Np), lambda n: (0, n)),            # x, b_blk images per step
                pl.BlockSpec((2 * Cpad, 9 * Cpad), lambda n: (0, 0)),  # both conv weights (constant)
                pl.BlockSpec((4 * Cpad, b_blk), lambda n: (n, 0)),     # packed per-image AdaIN params
            ],
            out_specs=pl.BlockSpec((Cpad, Np), lambda n: (0, n)),
        ),
        compiler_params=pltpu.CompilerParams(
            dimension_semantics=("parallel",)),                        # batch steps split across TCs
    )(mask, x_flat, w_packed, ada_packed)

    out = jnp.transpose(out_flat.reshape(Cpad, N, P), (1, 0, 2))[:, :C, :]
    return out.reshape(N, C, H, W).astype(x_nchw.dtype)


# ---------------- pure-JAX reference (correctness check; includes the conv biases) ----------------
def ffblock_ref(x_nchw, w1_oihw, b1, g1, be1, w2_oihw, b2, g2, be2):
    def conv(x, w, b):
        y = lax.conv_general_dilated(x, w, (1, 1), "SAME",
                                     dimension_numbers=("NCHW", "OIHW", "NCHW"))
        return y + b[None, :, None, None]

    def adain(x, g, be):
        mean = jnp.mean(x, axis=(2, 3), keepdims=True)
        var = jnp.mean((x - mean) ** 2, axis=(2, 3), keepdims=True)
        xn = (x - mean) / jnp.sqrt(var + EPS)
        return xn * g[:, :, None, None] + be[:, :, None, None]

    h = conv(x_nchw, w1_oihw, b1)
    h = adain(h, g1, be1)
    h = jax.nn.gelu(h, approximate=False)
    h = conv(h, w2_oihw, b2)
    h = adain(h, g2, be2)
    return h + x_nchw


if __name__ == "__main__":
    N, C, H, W = 2, 4, 16, 16                 # dim = 4
    key = jax.random.PRNGKey(0)
    ks = jax.random.split(key, 9)

    x = jax.random.normal(ks[0], (N, C, H, W), jnp.float32)

    w1_oihw = jax.random.normal(ks[1], (C, C, 3, 3), jnp.float32) * 0.2
    w2_oihw = jax.random.normal(ks[2], (C, C, 3, 3), jnp.float32) * 0.2
    # Conv biases: fed to the reference only — exactly cancelled by the following instance norm,
    # so the bias-free kernel must still match.
    b1 = jax.random.normal(ks[3], (C,), jnp.float32) * 0.1
    b2 = jax.random.normal(ks[4], (C,), jnp.float32) * 0.1
    # AdaIN weight/bias are externally assigned (shape (b*c,) in torch) -> (N, C) here
    g1 = 1.0 + 0.1 * jax.random.normal(ks[5], (N, C), jnp.float32)
    be1 = 0.1 * jax.random.normal(ks[6], (N, C), jnp.float32)
    g2 = 1.0 + 0.1 * jax.random.normal(ks[7], (N, C), jnp.float32)
    be2 = 0.05 * jax.random.normal(ks[8], (N, C), jnp.float32)

    out = jax.block_until_ready(
        ffblock_forward(x, w1_oihw, w2_oihw, g1, be1, g2, be2))
    ref = jax.block_until_ready(
        ffblock_ref(x, w1_oihw, b1, g1, be1, w2_oihw, b2, g2, be2))

    if not np.allclose(np.asarray(out), np.asarray(ref), atol=1e-2, rtol=1e-2):
        raise AssertionError("Pallas FFBlock output does not match JAX reference")

    print("KERNEL_OK")
</pallas_src>

<mosaic_0001>
module attributes {stable_mosaic.version = 11 : i64} {
  func.func @kernel(%arg0: i32, %arg1: memref<72x256xf32, #tpu.memory_space<vmem>>, %arg2: memref<8x256xf32, #tpu.memory_space<vmem>>, %arg3: memref<16x72xf32, #tpu.memory_space<vmem>>, %arg4: memref<32x1xf32, #tpu.memory_space<vmem>>, %arg5: memref<8x256xf32, #tpu.memory_space<vmem>>) attributes {dimension_semantics = [#tpu.dimension_semantics<parallel>], iteration_bounds = array<i64: 2>, scalar_prefetch = 0 : i64, scratch_operands = 0 : i64, tpu.core_type = #tpu.core_type<tc>, window_params = [{pipeline_mode = #tpu.pipeline_mode<synchronous>, transform_indices = @transform_0, window_bounds = array<i64: 72, 256>}, {transform_indices = @transform_1, window_bounds = array<i64: 8, 256>}, {pipeline_mode = #tpu.pipeline_mode<synchronous>, transform_indices = @transform_2, window_bounds = array<i64: 16, 72>}, {transform_indices = @transform_3, window_bounds = array<i64: 32, 1>}, {transform_indices = @transform_4, window_bounds = array<i64: 8, 256>}]} {
    %c0 = arith.constant 0 : index
    %c0_0 = arith.constant 0 : index
    %0 = vector.load %arg2[%c0, %c0_0] : memref<8x256xf32, #tpu.memory_space<vmem>>, vector<8x256xf32>
    %c0_1 = arith.constant 0 : index
    %c0_2 = arith.constant 0 : index
    %1 = vector.load %arg1[%c0_1, %c0_2] : memref<72x256xf32, #tpu.memory_space<vmem>>, vector<72x256xf32>
    %c0_3 = arith.constant 0 : index
    %c0_4 = arith.constant 0 : index
    %2 = vector.load %arg3[%c0_3, %c0_4] : memref<16x72xf32, #tpu.memory_space<vmem>>, vector<8x72xf32>
    %c8 = arith.constant 8 : index
    %c0_5 = arith.constant 0 : index
    %3 = vector.load %arg3[%c8, %c0_5] : memref<16x72xf32, #tpu.memory_space<vmem>>, vector<8x72xf32>
    %c0_6 = arith.constant 0 : index
    %c0_7 = arith.constant 0 : index
    %4 = vector.load %arg4[%c0_6, %c0_7] : memref<32x1xf32, #tpu.memory_space<vmem>>, vector<8x1xf32>
    %c8_8 = arith.constant 8 : index
    %c0_9 = arith.constant 0 : index
    %5 = vector.load %arg4[%c8_8, %c0_9] : memref<32x1xf32, #tpu.memory_space<vmem>>, vector<8x1xf32>
    %c16 = arith.constant 16 : index
    %c0_10 = arith.constant 0 : index
    %6 = vector.load %arg4[%c16, %c0_10] : memref<32x1xf32, #tpu.memory_space<vmem>>, vector<8x1xf32>
    %c24 = arith.constant 24 : index
    %c0_11 = arith.constant 0 : index
    %7 = vector.load %arg4[%c24, %c0_11] : memref<32x1xf32, #tpu.memory_space<vmem>>, vector<8x1xf32>
    %c17_i32 = arith.constant 17 : i32
    %8 = tpu.dynamic_rotate %0 by %c17_i32 dim 1 : vector<8x256xf32>, i32 -> vector<8x256xf32>
    %c16_i32 = arith.constant 16 : i32
    %9 = tpu.dynamic_rotate %0 by %c16_i32 dim 1 : vector<8x256xf32>, i32 -> vector<8x256xf32>
    %c15_i32 = arith.constant 15 : i32
    %10 = tpu.dynamic_rotate %0 by %c15_i32 dim 1 : vector<8x256xf32>, i32 -> vector<8x256xf32>
    %c1_i32 = arith.constant 1 : i32
    %11 = tpu.dynamic_rotate %0 by %c1_i32 dim 1 : vector<8x256xf32>, i32 -> vector<8x256xf32>
    %c255_i32 = arith.constant 255 : i32
    %12 = tpu.dynamic_rotate %0 by %c255_i32 dim 1 : vector<8x256xf32>, i32 -> vector<8x256xf32>
    %c241_i32 = arith.constant 241 : i32
    %13 = tpu.dynamic_rotate %0 by %c241_i32 dim 1 : vector<8x256xf32>, i32 -> vector<8x256xf32>
    %c240_i32 = arith.constant 240 : i32
    %14 = tpu.dynamic_rotate %0 by %c240_i32 dim 1 : vector<8x256xf32>, i32 -> vector<8x256xf32>
    %c239_i32 = arith.constant 239 : i32
    %15 = tpu.dynamic_rotate %0 by %c239_i32 dim 1 : vector<8x256xf32>, i32 -> vector<8x256xf32>
    %16 = tpu.concatenate %8, %9, %10, %11, %0, %12, %13, %14, %15 in 0 : vector<8x256xf32>, vector<8x256xf32>, vector<8x256xf32>, vector<8x256xf32>, vector<8x256xf32>, vector<8x256xf32>, vector<8x256xf32>, vector<8x256xf32>, vector<8x256xf32> -> vector<72x256xf32>
    %17 = arith.mulf %16, %1 : vector<72x256xf32>
    %cst = arith.constant dense<0.000000e+00> : vector<8x256xf32>
    %18 = tpu.matmul %2, %17, %cst {dimension_numbers = #tpu.dot_dimension_numbers<[1], [0], [0], [1], [0, 0, 1, 1], [], []>} : vector<8x72xf32>, vector<72x256xf32>, vector<8x256xf32> -> vector<8x256xf32>
    %cst_12 = arith.constant dense<0.000000e+00> : vector<8xf32>
    %19 = vector.multi_reduction <add>, %18, %cst_12 [1] : vector<8x256xf32> to vector<8xf32>
    %20 = vector.shape_cast %19 : vector<8xf32> to vector<8x1xf32>
    %21 = arith.mulf %18, %18 : vector<8x256xf32>
    %cst_13 = arith.constant dense<0.000000e+00> : vector<8xf32>
    %22 = vector.multi_reduction <add>, %21, %cst_13 [1] : vector<8x256xf32> to vector<8xf32>
    %23 = vector.shape_cast %22 : vector<8xf32> to vector<8x1xf32>
    %cst_14 = arith.constant 3.906250e-03 : f32
    %24 = vector.broadcast %cst_14 : f32 to vector<8x1xf32>
    %25 = arith.mulf %20, %24 : vector<8x1xf32>
    %cst_15 = arith.constant 3.906250e-03 : f32
    %26 = vector.broadcast %cst_15 : f32 to vector<8x1xf32>
    %27 = arith.mulf %23, %26 : vector<8x1xf32>
    %28 = arith.mulf %25, %25 : vector<8x1xf32>
    %29 = arith.subf %27, %28 : vector<8x1xf32>
    %cst_16 = arith.constant 0.000000e+00 : f32
    %30 = vector.broadcast %cst_16 : f32 to vector<8x1xf32>
    %31 = arith.maximumf %29, %30 : vector<8x1xf32>
    %cst_17 = arith.constant 9.99999974E-6 : f32
    %32 = vector.broadcast %cst_17 : f32 to vector<8x1xf32>
    %33 = arith.addf %31, %32 : vector<8x1xf32>
    %34 = math.rsqrt %33 : vector<8x1xf32>
    %35 = arith.mulf %4, %34 : vector<8x1xf32>
    %36 = arith.mulf %25, %35 : vector<8x1xf32>
    %37 = arith.subf %5, %36 : vector<8x1xf32>
    %38 = vector.broadcast %35 : vector<8x1xf32> to vector<8x256xf32>
    %39 = arith.mulf %18, %38 : vector<8x256xf32>
    %40 = vector.broadcast %37 : vector<8x1xf32> to vector<8x256xf32>
    %41 = arith.addf %39, %40 : vector<8x256xf32>
    %cst_18 = arith.constant 5.000000e-01 : f32
    %42 = vector.broadcast %cst_18 : f32 to vector<8x256xf32>
    %43 = arith.mulf %42, %41 : vector<8x256xf32>
    %cst_19 = arith.constant 0.707106769 : f32
    %44 = vector.broadcast %cst_19 : f32 to vector<8x256xf32>
    %45 = arith.mulf %41, %44 : vector<8x256xf32>
    %46 = math.erf %45 : vector<8x256xf32>
    %cst_20 = arith.constant 1.000000e+00 : f32
    %47 = vector.broadcast %cst_20 : f32 to vector<8x256xf32>
    %48 = arith.addf %47, %46 : vector<8x256xf32>
    %49 = arith.mulf %43, %48 : vector<8x256xf32>
    %c17_i32_21 = arith.constant 17 : i32
    %50 = tpu.dynamic_rotate %49 by %c17_i32_21 dim 1 : vector<8x256xf32>, i32 -> vector<8x256xf32>
    %c16_i32_22 = arith.constant 16 : i32
    %51 = tpu.dynamic_rotate %49 by %c16_i32_22 dim 1 : vector<8x256xf32>, i32 -> vector<8x256xf32>
    %c15_i32_23 = arith.constant 15 : i32
    %52 = tpu.dynamic_rotate %49 by %c15_i32_23 dim 1 : vector<8x256xf32>, i32 -> vector<8x256xf32>
    %c1_i32_24 = arith.constant 1 : i32
    %53 = tpu.dynamic_rotate %49 by %c1_i32_24 dim 1 : vector<8x256xf32>, i32 -> vector<8x256xf32>
    %c255_i32_25 = arith.constant 255 : i32
    %54 = tpu.dynamic_rotate %49 by %c255_i32_25 dim 1 : vector<8x256xf32>, i32 -> vector<8x256xf32>
    %c241_i32_26 = arith.constant 241 : i32
    %55 = tpu.dynamic_rotate %49 by %c241_i32_26 dim 1 : vector<8x256xf32>, i32 -> vector<8x256xf32>
    %c240_i32_27 = arith.constant 240 : i32
    %56 = tpu.dynamic_rotate %49 by %c240_i32_27 dim 1 : vector<8x256xf32>, i32 -> vector<8x256xf32>
    %c239_i32_28 = arith.constant 239 : i32
    %57 = tpu.dynamic_rotate %49 by %c239_i32_28 dim 1 : vector<8x256xf32>, i32 -> vector<8x256xf32>
    %58 = tpu.concatenate %50, %51, %52, %53, %49, %54, %55, %56, %57 in 0 : vector<8x256xf32>, vector<8x256xf32>, vector<8x256xf32>, vector<8x256xf32>, vector<8x256xf32>, vector<8x256xf32>, vector<8x256xf32>, vector<8x256xf32>, vector<8x256xf32> -> vector<72x256xf32>
    %59 = arith.mulf %58, %1 : vector<72x256xf32>
    %cst_29 = arith.constant dense<0.000000e+00> : vector<8x256xf32>
    %60 = tpu.matmul %3, %59, %cst_29 {dimension_numbers = #tpu.dot_dimension_numbers<[1], [0], [0], [1], [0, 0, 1, 1], [], []>} : vector<8x72xf32>, vector<72x256xf32>, vector<8x256xf32> -> vector<8x256xf32>
    %cst_30 = arith.constant dense<0.000000e+00> : vector<8xf32>
    %61 = vector.multi_reduction <add>, %60, %cst_30 [1] : vector<8x256xf32> to vector<8xf32>
    %62 = vector.shape_cast %61 : vector<8xf32> to vector<8x1xf32>
    %63 = arith.mulf %60, %60 : vector<8x256xf32>
    %cst_31 = arith.constant dense<0.000000e+00> : vector<8xf32>
    %64 = vector.multi_reduction <add>, %63, %cst_31 [1] : vector<8x256xf32> to vector<8xf32>
    %65 = vector.shape_cast %64 : vector<8xf32> to vector<8x1xf32>
    %cst_32 = arith.constant 3.906250e-03 : f32
    %66 = vector.broadcast %cst_32 : f32 to vector<8x1xf32>
    %67 = arith.mulf %62, %66 : vector<8x1xf32>
    %cst_33 = arith.constant 3.906250e-03 : f32
    %68 = vector.broadcast %cst_33 : f32 to vector<8x1xf32>
    %69 = arith.mulf %65, %68 : vector<8x1xf32>
    %70 = arith.mulf %67, %67 : vector<8x1xf32>
    %71 = arith.subf %69, %70 : vector<8x1xf32>
    %cst_34 = arith.constant 0.000000e+00 : f32
    %72 = vector.broadcast %cst_34 : f32 to vector<8x1xf32>
    %73 = arith.maximumf %71, %72 : vector<8x1xf32>
    %cst_35 = arith.constant 9.99999974E-6 : f32
    %74 = vector.broadcast %cst_35 : f32 to vector<8x1xf32>
    %75 = arith.addf %73, %74 : vector<8x1xf32>
    %76 = math.rsqrt %75 : vector<8x1xf32>
    %77 = arith.mulf %6, %76 : vector<8x1xf32>
    %78 = arith.mulf %67, %77 : vector<8x1xf32>
    %79 = arith.subf %7, %78 : vector<8x1xf32>
    %80 = vector.broadcast %77 : vector<8x1xf32> to vector<8x256xf32>
    %81 = arith.mulf %60, %80 : vector<8x256xf32>
    %82 = vector.broadcast %79 : vector<8x1xf32> to vector<8x256xf32>
    %83 = arith.addf %81, %82 : vector<8x256xf32>
    %84 = arith.addf %83, %0 : vector<8x256xf32>
    %c0_36 = arith.constant 0 : index
    %c0_37 = arith.constant 0 : index
    %85 = vector.load %arg5[%c0_36, %c0_37] : memref<8x256xf32, #tpu.memory_space<vmem>>, vector<8x256xf32>
    tpu.vector_store %arg5[%c0_36, %c0_37], %84 {strides = array<i32>} : memref<8x256xf32, #tpu.memory_space<vmem>>, vector<8x256xf32>,
    return
  }
  func.func @transform_0(%arg0: i32) -> (i32, i32) {
    %c0_i32 = arith.constant 0 : i32
    %c0_i32_0 = arith.constant 0 : i32
    %c0_i32_1 = arith.constant 0 : i32
    return %c0_i32, %c0_i32_0 : i32, i32
  }
  func.func @transform_1(%arg0: i32) -> (i32, i32) {
    %c0_i32 = arith.constant 0 : i32
    %c0_i32_0 = arith.constant 0 : i32
    return %c0_i32, %arg0 : i32, i32
  }
  func.func @transform_2(%arg0: i32) -> (i32, i32) {
    %c0_i32 = arith.constant 0 : i32
    %c0_i32_0 = arith.constant 0 : i32
    %c0_i32_1 = arith.constant 0 : i32
    return %c0_i32, %c0_i32_0 : i32, i32
  }
  func.func @transform_3(%arg0: i32) -> (i32, i32) {
    %c0_i32 = arith.constant 0 : i32
    %c0_i32_0 = arith.constant 0 : i32
    return %arg0, %c0_i32 : i32, i32
  }
  func.func @transform_4(%arg0: i32) -> (i32, i32) {
    %c0_i32 = arith.constant 0 : i32
    %c0_i32_0 = arith.constant 0 : i32
    return %c0_i32, %arg0 : i32, i32
  }
}

</mosaic_0001>

<llo_original>
// kernel: tpu_custom_call.1
$region0: #{tpu_custom_call.1}
  #allocation0 [shape = 'u32[]', space=smem, size = 0x4, offset = 0x4, fixed_abs, tag = 'smem constant byte address 0x4 - core index']
  #allocation1 [shape = 'u32[72,128]{1,0:T(1,128)}', space=vmem, size = 0x9000, scoped, tag = 'internal scratch']
  %s0 = inlined_call_operand.hbm [shape: f32[72,256], index: 0, kind: input, shape index: {}]
  %s1 = inlined_call_operand.vmem [shape: f32[8,512], index: 1, kind: input, shape index: {}]
  %s2 = inlined_call_operand.vmem [shape: f32[16,72], index: 2, kind: input, shape index: {}]
  %s3 = inlined_call_operand.vmem [shape: f32[64,1], index: 3, kind: input, shape index: {}]
  %s4 = inlined_call_operand.hbm [shape: f32[8,512], index: 4, kind: output, shape index: {}]
  %s5 = sld [smem:[#allocation0]]
  $region53: #{tpu_custom_call.1} parent=0
    _
  %s7 = ssub.s32 1, %s5
  %s8 = scalar_select 0, %s7, %s5
  $region1: #{tpu_custom_call.1} parent=0
    #allocation2 [shape = 'u8[73728]{0}', space=vmem, size = 0x12000, scoped, tag = 'input window, operand 0, single buffered']
    #allocation3 [shape = 's32[2]{0}', space=sflag, size = 0x8, scoped, tag = 'scoped memory for tpu_custom_call.1']
    #allocation4 [shape = 's32[2]{0}', space=sflag, size = 0x8, scoped, tag = 'scoped memory for tpu_custom_call.1']
    #allocation5 [shape = 'u8[16384]{0}', space=vmem, size = 0x4000, scoped, tag = 'output window, operand 0']
    %9 = vsyncpa [#allocation3], 0
    %10 = vsyncpa [#allocation4], 0
    %s11 = scalar_lea.sflag [#allocation4], 1
    %12 = vsyncpa %s11, 0
    loop: start=0, step=1, limit=4
    $region2: #{tpu_custom_call.1} parent=1 // loop_pre_header
      _
    $region3: #{tpu_custom_call.1} parent=1 // loop_header
      %s14 = sphi 0, %s18
      %p15 = scmp.ge.s32.totalorder %s14, 4
      %s22 = sphi 0, %s22
      %s24 = sphi 0, %s22
      %s25 = sphi 0, %s24
      %s39 = sphi 0, %s25
      %s45 = sphi 0, %s47
      %s48 = sphi 0, %s45
      %s49 = sphi 0, %s48
      %s65 = sphi 0, %s49
      %s69 = sphi 0, %s69
      %s71 = sphi 0, %s69
      %s72 = sphi 0, %s71
      %s86 = sphi 0, %s72
      %s92 = sphi 0, %s94
      %s95 = sphi 0, %s92
      %s96 = sphi 0, %s95
      %s112 = sphi 0, %s96
      %s118 = sphi 0, %s120
      %s121 = sphi 0, %s118
      %s122 = sphi 0, %s121
      %s138 = sphi 0, %s122
    $region4: #{tpu_custom_call.1} parent=1 // loop_header_branch
      %17 = sbr.rel (%p15) target = $region8
    $region5: #{tpu_custom_call.1} parent=1 // loop_body
      %s19 = ssub.s32 %s14, 1
      %s20 = ssub.s32 %s14, 2
      %s21 = sadd.s32 %s14, 1
      %s23 = sadd.s32 %s22, 1
      %p26 = scmp.eq.s32.totalorder %s14, 1
      %p27 = scmp.ne.s32.totalorder %s22, %s24
      %p28 = scmp.eq.s32.totalorder %s14, 0
      %p29 = por %p27, %p28
      %p30 = scmp.ne.s32.totalorder %s22, %s24
      %p31 = scmp.eq.s32.totalorder %s19, 1
      %p32 = por %p30, %p31
      %p33 = scmp.ne.s32.totalorder %s24, %s25
      %p34 = scmp.eq.s32.totalorder %s19, 0
      %p35 = por %p33, %p34
      %p36 = scmp.ne.s32.totalorder %s24, %s25
      %p37 = scmp.eq.s32.totalorder %s20, 1
      %p38 = por %p36, %p37
      %p40 = scmp.ne.s32.totalorder %s25, %s39
      %p41 = scmp.eq.s32.totalorder %s20, 0
      %p42 = por %p40, %p41
      %s43 = ssub.s32 %s14, %s21
      %p44 = scmp.eq.s32.totalorder %s43, 0
      %s46 = sadd.s32 %s45, 1
      %s47 = scalar_select %p44, %s45, %s46
      %p50 = pneg %p44
      %p51 = scmp.eq.s32.totalorder %s14, 1
      %p52 = por %p50, %p51
      %p53 = scmp.ne.s32.totalorder %s45, %s48
      %p54 = scmp.eq.s32.totalorder %s14, 0
      %p55 = por %p53, %p54
      %p56 = scmp.ne.s32.totalorder %s45, %s48
      %p57 = scmp.eq.s32.totalorder %s19, 1
      %p58 = por %p56, %p57
      %p59 = scmp.ne.s32.totalorder %s48, %s49
      %p60 = scmp.eq.s32.totalorder %s19, 0
      %p61 = por %p59, %p60
      %p62 = scmp.ne.s32.totalorder %s48, %s49
      %p63 = scmp.eq.s32.totalorder %s20, 1
      %p64 = por %p62, %p63
      %p66 = scmp.ne.s32.totalorder %s49, %s65
      %p67 = scmp.eq.s32.totalorder %s20, 0
      %p68 = por %p66, %p67
      %s70 = sadd.s32 %s69, 1
      %p73 = scmp.eq.s32.totalorder %s14, 1
      %p74 = scmp.ne.s32.totalorder %s69, %s71
      %p75 = scmp.eq.s32.totalorder %s14, 0
      %p76 = por %p74, %p75
      %p77 = scmp.ne.s32.totalorder %s69, %s71
      %p78 = scmp.eq.s32.totalorder %s19, 1
      %p79 = por %p77, %p78
      %p80 = scmp.ne.s32.totalorder %s71, %s72
      %p81 = scmp.eq.s32.totalorder %s19, 0
      %p82 = por %p80, %p81
      %p83 = scmp.ne.s32.totalorder %s71, %s72
      %p84 = scmp.eq.s32.totalorder %s20, 1
      %p85 = por %p83, %p84
      %p87 = scmp.ne.s32.totalorder %s72, %s86
      %p88 = scmp.eq.s32.totalorder %s20, 0
      %p89 = por %p87, %p88
      %s90 = ssub.s32 %s14, %s21
      %p91 = scmp.eq.s32.totalorder %s90, 0
      %s93 = sadd.s32 %s92, 1
      %s94 = scalar_select %p91, %s92, %s93
      %p97 = pneg %p91
      %p98 = scmp.eq.s32.totalorder %s14, 1
      %p99 = por %p97, %p98
      %p100 = scmp.ne.s32.totalorder %s92, %s95
      %p101 = scmp.eq.s32.totalorder %s14, 0
      %p102 = por %p100, %p101
      %p103 = scmp.ne.s32.totalorder %s92, %s95
      %p104 = scmp.eq.s32.totalorder %s19, 1
      %p105 = por %p103, %p104
      %p106 = scmp.ne.s32.totalorder %s95, %s96
      %p107 = scmp.eq.s32.totalorder %s19, 0
      %p108 = por %p106, %p107
      %p109 = scmp.ne.s32.totalorder %s95, %s96
      %p110 = scmp.eq.s32.totalorder %s20, 1
      %p111 = por %p109, %p110
      %p113 = scmp.ne.s32.totalorder %s96, %s112
      %p114 = scmp.eq.s32.totalorder %s20, 0
      %p115 = por %p113, %p114
      %s116 = ssub.s32 %s14, %s21
      %p117 = scmp.eq.s32.totalorder %s116, 0
      %s119 = sadd.s32 %s118, 1
      %s120 = scalar_select %p117, %s118, %s119
      %p123 = pneg %p117
      %p124 = scmp.eq.s32.totalorder %s14, 1
      %p125 = por %p123, %p124
      %p126 = scmp.ne.s32.totalorder %s118, %s121
      %p127 = scmp.eq.s32.totalorder %s14, 0
      %p128 = por %p126, %p127
      %p129 = scmp.ne.s32.totalorder %s118, %s121
      %p130 = scmp.eq.s32.totalorder %s19, 1
      %p131 = por %p129, %p130
      %p132 = scmp.ne.s32.totalorder %s121, %s122
      %p133 = scmp.eq.s32.totalorder %s19, 0
      %p134 = por %p132, %p133
      %p135 = scmp.ne.s32.totalorder %s121, %s122
      %p136 = scmp.eq.s32.totalorder %s20, 1
      %p137 = por %p135, %p136
      %p139 = scmp.ne.s32.totalorder %s122, %s138
      %p140 = scmp.eq.s32.totalorder %s20, 0
      %p141 = por %p139, %p140
      %p142 = scmp.le.s32.totalorder 1, %s14
      %p143 = scmp.lt.s32.totalorder %s14, 3
      %p144 = pnand %p142, %p143
      %p145 = pneg %p144
      // Predicated region
      $region9: #{tpu_custom_call.1} parent=5 // pred_check
        _
      $region10: #{tpu_custom_call.1} parent=5 // pred_check_branch
        %147 = sbr.rel (%p144) target = $region12
      $region11: #{tpu_custom_call.1} parent=5 // pred_region
        %s148 = ssub.s32 %s14, 1
        // Predicated region
        $region13: #{tpu_custom_call.1} parent=11 // pred_check
          %p149 = pneg %p35
        $region14: #{tpu_custom_call.1} parent=11 // pred_check_branch
          %151 = sbr.rel (%p149) target = $region16
        $region15: #{tpu_custom_call.1} parent=11 // pred_region
          %153 = vsyncadd [#allocation3], 0
          %s154 = sshll.u32 %s0, 4
          %s155 = int_to_ptr.hbm [resolvable:$true] %s154
          %s156 = sshll.u32 [#allocation2], 4
          %s157 = int_to_ptr.vmem [resolvable:$true] %s156
          %162 = dma.hbm_to_vmem [thread:$0]  %s155, 2304, %s157, [#allocation3], 256, 256, 16
        $region16: #{tpu_custom_call.1} parent=11 // pred_fallthru
          _
        // Predicated region
        $region17: #{tpu_custom_call.1} parent=11 // pred_check
          %p163 = pneg %p82
        $region18: #{tpu_custom_call.1} parent=11 // pred_check_branch
          %165 = sbr.rel (%p163) target = $region20
        $region19: #{tpu_custom_call.1} parent=11 // pred_region
          _
        $region20: #{tpu_custom_call.1} parent=11 // pred_fallthru
          _
      $region12: #{tpu_custom_call.1} parent=5 // pred_fallthru
        _
      %p166 = scmp.lt.s32.totalorder %s14, 2
      // Predicated region
      $region21: #{tpu_custom_call.1} parent=5 // pred_check
        %p167 = pneg %p166
      $region22: #{tpu_custom_call.1} parent=5 // pred_check_branch
        %169 = sbr.rel (%p167) target = $region24
      $region23: #{tpu_custom_call.1} parent=5 // pred_region
        // Predicated region
        $region25: #{tpu_custom_call.1} parent=23 // pred_check
          %p170 = pneg %p55
        $region26: #{tpu_custom_call.1} parent=23 // pred_check_branch
          %172 = sbr.rel (%p170) target = $region28
        $region27: #{tpu_custom_call.1} parent=23 // pred_region
          %s173 = smul.u32 2, %s14
          %p174 = scmp.lt.s32.totalorder %s173, 3
          %s175 = scalar_select %p174, %s173, 3
          %s176 = smul.addr %s175, 8
          %s177 = scalar_lea.vmem %s1, %s176
          %s178 = smul.u32 2, %s14
        $region28: #{tpu_custom_call.1} parent=23 // pred_fallthru
          _
        // Predicated region
        $region29: #{tpu_custom_call.1} parent=23 // pred_check
          %p179 = pneg %p102
        $region30: #{tpu_custom_call.1} parent=23 // pred_check_branch
          %181 = sbr.rel (%p179) target = $region32
        $region31: #{tpu_custom_call.1} parent=23 // pred_region
          %s182 = smul.u32 4, %s14
          %p183 = scmp.lt.s32.totalorder %s182, 7
          %s184 = scalar_select %p183, %s182, 7
          %s185 = smul.addr %s184, 8
          %s186 = scalar_lea.vmem %s3, %s185
          %s187 = smul.u32 4, %s14
        $region32: #{tpu_custom_call.1} parent=23 // pred_fallthru
          _
      $region24: #{tpu_custom_call.1} parent=5 // pred_fallthru
        _
      %p188 = scmp.le.s32.totalorder 1, %s14
      %p189 = scmp.lt.s32.totalorder %s14, 3
      %p190 = pnand %p188, %p189
      %p191 = pneg %p190
      // Predicated region
      $region33: #{tpu_custom_call.1} parent=5 // pred_check
        _
      $region34: #{tpu_custom_call.1} parent=5 // pred_check_branch
        %193 = sbr.rel (%p190) target = $region36
      $region35: #{tpu_custom_call.1} parent=5 // pred_region
        %s194 = ssub.s32 %s14, 1
        // Predicated region
        $region37: #{tpu_custom_call.1} parent=35 // pred_check
          %p195 = pneg %p35
        $region38: #{tpu_custom_call.1} parent=35 // pred_check_branch
          %197 = sbr.rel (%p195) target = $region40
        $region39: #{tpu_custom_call.1} parent=35 // pred_region
          %199 = dma.done [#allocation3], 2304
        $region40: #{tpu_custom_call.1} parent=35 // pred_fallthru
          _
        %p200 = pneg %p35
        %p201 = pneg %p32
        %s202 = smul.u32 2, %s19
        %p203 = scmp.lt.s32.totalorder %s202, 3
        %s204 = scalar_select %p203, %s202, 3
        %s205 = smul.addr %s204, 8
        %s206 = scalar_lea.vmem %s1, %s205
        %p207 = pneg %p61
        %p208 = pneg %p58
        %p209 = pneg %p82
        %p210 = pneg %p79
        %s211 = smul.u32 4, %s19
        %p212 = scmp.lt.s32.totalorder %s211, 7
        %s213 = scalar_select %p212, %s211, 7
        %s214 = smul.addr %s213, 8
        %s215 = scalar_lea.vmem %s3, %s214
        %p216 = pneg %p108
        %p217 = pneg %p105
        %p218 = pneg %p134
        %p219 = pneg %p131
        %s220 = sand.u32 %s121, 1
        %s221 = scalar_lea.sflag [#allocation4], %s220
        %s222 = sand.u32 %s121, 1
        %s223 = smul.addr %s222, 16
        %s224 = scalar_lea.vmem [#allocation5], %s223
        %s225 = smul.u32 2, %s19
        %p226 = scmp.lt.s32.totalorder %s225, 3
        %s227 = scalar_select %p226, %s225, 3
        %s228 = smul.addr %s227, 8
        %s229 = scalar_lea.vmem %s1, %s228
        %s230 = smul.u32 2, %s19
        %s231 = smul.u32 4, %s19
        %p232 = scmp.lt.s32.totalorder %s231, 7
        %s233 = scalar_select %p232, %s231, 7
        %s234 = smul.addr %s233, 8
        %s235 = scalar_lea.vmem %s3, %s234
        %s236 = smul.u32 4, %s19
        %s237 = smul.u32 2, %s19
        %v238 = vld [vmem:[%s229] sm:$0xff]
        %v239 = vld [vmem:[%s229 + $0x8] sm:$0xff]
        %v240 = vld [vmem:[#allocation2] sm:$0xff]
        %v241 = vld [vmem:[#allocation2 + $0x8] sm:$0xff]
        %v242 = vld [vmem:[#allocation2 + $0x10] sm:$0xff]
        %v243 = vld [vmem:[#allocation2 + $0x18] sm:$0xff]
        %v244 = vld [vmem:[#allocation2 + $0x20] sm:$0xff]
        %v245 = vld [vmem:[#allocation2 + $0x28] sm:$0xff]
        %v246 = vld [vmem:[#allocation2 + $0x30] sm:$0xff]
        %v247 = vld [vmem:[#allocation2 + $0x38] sm:$0xff]
        %v248 = vld [vmem:[#allocation2 + $0x40] sm:$0xff]
        %v249 = vld [vmem:[#allocation2 + $0x48] sm:$0xff]
        %v250 = vld [vmem:[#allocation2 + $0x50] sm:$0xff]
        %v251 = vld [vmem:[#allocation2 + $0x58] sm:$0xff]
        %v252 = vld [vmem:[#allocation2 + $0x60] sm:$0xff]
        %v253 = vld [vmem:[#allocation2 + $0x68] sm:$0xff]
        %v254 = vld [vmem:[#allocation2 + $0x70] sm:$0xff]
        %v255 = vld [vmem:[#allocation2 + $0x78] sm:$0xff]
        %v256 = vld [vmem:[#allocation2 + $0x80] sm:$0xff]
        %v257 = vld [vmem:[#allocation2 + $0x88] sm:$0xff]
        %v258 = vld [vmem:[%s2] sm:$0xff]
        %v259 = vld [vmem:[%s2 + $0x8] sm:$0xff]
        %v260 = vld [vmem:[%s235] sm:$0xff]
        %v261 = vld [vmem:[%s235 + $0x8] sm:$0xff]
        %v262 = vld [vmem:[%s235 + $0x10] sm:$0xff]
        %v263 = vld [vmem:[%s235 + $0x18] sm:$0xff]
        %264 = vrot.lane.b32.xlu0 %v238, 17
        %v265 = vpop.permute.xlu0 %264
        %266 = vrot.lane.b32.xlu0 %v239, 17
        %v267 = vpop.permute.xlu0 %266
        %v268 = vlaneseq
        %v269 = vand.u32 %v268, 127
        %vm270 = vcmp.lt.s32.totalorder %v269, 17
        %v271 = vsel %vm270, %v265, %v267
        %v272 = vsel %vm270, %v267, %v265
        %273 = vrot.lane.b32.xlu0 %v238, 16
        %v274 = vpop.permute.xlu0 %273
        %275 = vrot.lane.b32.xlu0 %v239, 16
        %v276 = vpop.permute.xlu0 %275
        %vm277 = vcmp.lt.s32.totalorder %v269, 16
        %v278 = vsel %vm277, %v274, %v276
        %v279 = vsel %vm277, %v276, %v274
        %280 = vrot.lane.b32.xlu0 %v238, 15
        %v281 = vpop.permute.xlu0 %280
        %282 = vrot.lane.b32.xlu0 %v239, 15
        %v283 = vpop.permute.xlu0 %282
        %vm284 = vcmp.lt.s32.totalorder %v269, 15
        %v285 = vsel %vm284, %v281, %v283
        %v286 = vsel %vm284, %v283, %v281
        %287 = vrot.lane.b32.xlu0 %v238, 1
        %v288 = vpop.permute.xlu0 %287
        %289 = vrot.lane.b32.xlu0 %v239, 1
        %v290 = vpop.permute.xlu0 %289
        %vm291 = vcmp.lt.s32.totalorder %v269, 1
        %v292 = vsel %vm291, %v288, %v290
        %v293 = vsel %vm291, %v290, %v288
        %294 = vrot.lane.b32.xlu0 %v238, 127
        %v295 = vpop.permute.xlu0 %294
        %296 = vrot.lane.b32.xlu0 %v239, 127
        %v297 = vpop.permute.xlu0 %296
        %vm298 = vcmp.lt.s32.totalorder %v269, 127
        %v299 = vsel %vm298, %v295, %v297
        %v300 = vsel %vm298, %v297, %v295
        %301 = vrot.lane.b32.xlu0 %v238, 113
        %v302 = vpop.permute.xlu0 %301
        %303 = vrot.lane.b32.xlu0 %v239, 113
        %v304 = vpop.permute.xlu0 %303
        %vm305 = vcmp.lt.s32.totalorder %v269, 113
        %v306 = vsel %vm305, %v302, %v304
        %v307 = vsel %vm305, %v304, %v302
        %308 = vrot.lane.b32.xlu0 %v238, 112
        %v309 = vpop.permute.xlu0 %308
        %310 = vrot.lane.b32.xlu0 %v239, 112
        %v311 = vpop.permute.xlu0 %310
        %vm312 = vcmp.lt.s32.totalorder %v269, 112
        %v313 = vsel %vm312, %v309, %v311
        %v314 = vsel %vm312, %v311, %v309
        %315 = vrot.lane.b32.xlu0 %v238, 111
        %v316 = vpop.permute.xlu0 %315
        %317 = vrot.lane.b32.xlu0 %v239, 111
        %v318 = vpop.permute.xlu0 %317
        %vm319 = vcmp.lt.s32.totalorder %v269, 111
        %v320 = vsel %vm319, %v316, %v318
        %v321 = vsel %vm319, %v318, %v316
        %v322 = vmul.f32 %v272, %v240
        %v323 = vmul.f32 %v271, %v241
        %v324 = vmul.f32 %v279, %v242
        %v325 = vmul.f32 %v278, %v243
        %v326 = vmul.f32 %v286, %v244
        %v327 = vmul.f32 %v285, %v245
        %v328 = vmul.f32 %v293, %v246
        %v329 = vmul.f32 %v292, %v247
        %v330 = vmul.f32 %v238, %v248
        %v331 = vmul.f32 %v239, %v249
        %v332 = vmul.f32 %v299, %v250
        %v333 = vmul.f32 %v300, %v251
        %v334 = vmul.f32 %v306, %v252
        %v335 = vmul.f32 %v307, %v253
        %v336 = vmul.f32 %v313, %v254
        %v337 = vmul.f32 %v314, %v255
        %v338 = vmul.f32 %v320, %v256
        %v339 = vmul.f32 %v321, %v257
        %vm340 = vcmask 588800
        %v342 = vsel %vm340, %v258, 0
        %344 = vmatpush.msra.mxu0 0.0
        %345 = vmatpush.msra.mxu0 0.0
        %346 = vmatpush.msra.mxu0 0.0
        %347 = vmatpush.msra.mxu0 0.0
        %348 = vmatpush.msra.mxu0 0.0
        %349 = vmatpush.msra.mxu0 0.0
        %350 = vmatpush.msra.mxu0 0.0
        %351 = vmatpush.msra.mxu0 %v338
        %352 = vmatpush.msra.mxu0 %v336
        %353 = vmatpush.msra.mxu0 %v334
        %354 = vmatpush.msra.mxu0 %v332
        %355 = vmatpush.msra.mxu0 %v330
        %356 = vmatpush.msra.mxu0 %v328
        %357 = vmatpush.msra.mxu0 %v326
        %358 = vmatpush.msra.mxu0 %v324
        %359 = vmatpush.msra.mxu0 %v322
        %360 = vmatmul.f32.gmra.mxu0 %v342
        %v361 = vpop.f32.mrf.mxu0
        %v362 = vadd.f32 0.0, %v361
        %363 = vdwg.mxu0
        %364 = vmatpush.msra.mxu0 0.0
        %365 = vmatpush.msra.mxu0 0.0
        %366 = vmatpush.msra.mxu0 0.0
        %367 = vmatpush.msra.mxu0 0.0
        %368 = vmatpush.msra.mxu0 0.0
        %369 = vmatpush.msra.mxu0 0.0
        %370 = vmatpush.msra.mxu0 0.0
        %371 = vmatpush.msra.mxu0 %v339
        %372 = vmatpush.msra.mxu0 %v337
        %373 = vmatpush.msra.mxu0 %v335
        %374 = vmatpush.msra.mxu0 %v333
        %375 = vmatpush.msra.mxu0 %v331
        %376 = vmatpush.msra.mxu0 %v329
        %377 = vmatpush.msra.mxu0 %v327
        %378 = vmatpush.msra.mxu0 %v325
        %379 = vmatpush.msra.mxu0 %v323
        %380 = vmatmul.f32.gmra.mxu0 %v342
        %v381 = vpop.f32.mrf.mxu0
        %v382 = vadd.f32 0.0, %v381
        %383 = vdwg.mxu0
        %v384 = vadd.f32 %v362, %v382
        %385 = vadd.xlane.f32.xlu0 %v384
        %v386 = vpop.xlane.xlu0 %385
        %v387 = vmul.f32 %v362, %v362
        %v388 = vmul.f32 %v382, %v382
        %v389 = vadd.f32 %v387, %v388
        %390 = vadd.xlane.f32.xlu0 %v389
        %v391 = vpop.xlane.xlu0 %390
        %v392 = vmul.f32 %v386, 0.00390625
        %v393 = vmul.f32 %v391, 0.00390625
        %v394 = vmul.f32 %v392, %v392
        %v395 = vsub.f32 %v393, %v394
        %v396 = vmax.f32 %v395, 0.0
        %v397 = vadd.f32 %v396, 1e-05
        %v398 = vrsqrt.pop %v397
        %v399 = vmul.f32 %v398, %v397
        %v400 = vmul.f32 %v399, %v398
        %v401 = vmul.f32 0.5, %v400
        %v402 = vsub.f32 1.5, %v401
        %v403 = vmul.f32 %v398, %v402
        %vm404 = vweird.f32 %v397
        %vm405 = vweird.f32 %v398
        %vm406 = vmor %vm404, %vm405
        %v407 = vsel %vm406, %v398, %v403
        %v408 = vmul.f32 %v260, %v407
        %v409 = vmul.f32 %v392, %v408
        %v410 = vsub.f32 %v261, %v409
        %412 = vset.pattern.permute.xlu0 0
        %413 = vperm.xlu0 %412, %v408
        %v414 = vpop.permute.xlu0 %413
        %v416 = vmul.f32 %v362, %v414
        %v417 = vmul.f32 %v382, %v414
        %419 = vset.pattern.permute.xlu0 0
        %420 = vperm.xlu0 %419, %v410
        %v421 = vpop.permute.xlu0 %420
        %v423 = vadd.f32 %v416, %v421
        %v424 = vadd.f32 %v417, %v421
        %v425 = vmul.f32 %v423, 0.5
        %v426 = vmul.f32 %v424, 0.5
        %v427 = vmul.f32 %v423, 0.70710677
        %v428 = vmul.f32 %v424, 0.70710677
        %v429 = vmul.f32 %v427, %v427
        %v430 = vmin.f32 16.0, %v429
        %v431 = vmul.f32 %v430, 2.1237322e-06
        %v432 = vadd.f32 %v431, 0.00028619796
        %v433 = vmul.f32 %v430, %v432
        %v434 = vadd.f32 %v433, 0.0036580483
        %v435 = vmul.f32 %v430, %v434
        %v436 = vadd.f32 %v435, 0.05243302
        %v437 = vmul.f32 %v430, %v436
        %v438 = vadd.f32 %v437, 0.18741608
        %v439 = vmul.f32 %v430, %v438
        %v440 = vadd.f32 %v439, 1.1283791
        %v441 = vmul.f32 %v427, %v440
        %v442 = vmul.f32 %v430, 3.8918573e-05
        %v443 = vadd.f32 %v442, 0.001143296
        %v444 = vmul.f32 %v430, %v443
        %v445 = vadd.f32 %v444, 0.014752088
        %v446 = vmul.f32 %v430, %v445
        %v447 = vadd.f32 %v446, 0.112945676
        %v448 = vmul.f32 %v430, %v447
        %v449 = vadd.f32 %v448, 0.4994258
        %v450 = vmul.f32 %v430, %v449
        %v451 = vadd.f32 %v450, 1.0
        %v452 = vrcp.pop %v451
        %v453 = vmul.f32 %v451, %v452
        %v454 = vsub.f32 1.0, %v453
        %v455 = vmul.f32 %v452, %v454
        %v456 = vadd.f32 %v452, %v455
        %vm457 = vweird.f32 %v451
        %vm458 = vweird.f32 %v452
        %vm459 = vmor %vm457, %vm458
        %v460 = vsel %vm459, %v452, %v456
        %v461 = vand.u32 2147483647, %v451
        %vm462 = vcmp.eq.f32.partialorder %v461, 8.507059e+37
        %v463 = vand.u32 %v451, 2147483648
        %v464 = vor.u32 1.1754944e-38, %v463
        %v465 = vsel %vm462, %v464, %v460
        %v466 = vmul.f32 %v441, %v465
        %v467 = vmin.f32 %v466, 1.0
        %v468 = vmax.f32 %v467, -1.0
        %v469 = vmul.f32 %v428, %v428
        %v470 = vmin.f32 16.0, %v469
        %v471 = vmul.f32 %v470, 2.1237322e-06
        %v472 = vadd.f32 %v471, 0.00028619796
        %v473 = vmul.f32 %v470, %v472
        %v474 = vadd.f32 %v473, 0.0036580483
        %v475 = vmul.f32 %v470, %v474
        %v476 = vadd.f32 %v475, 0.05243302
        %v477 = vmul.f32 %v470, %v476
        %v478 = vadd.f32 %v477, 0.18741608
        %v479 = vmul.f32 %v470, %v478
        %v480 = vadd.f32 %v479, 1.1283791
        %v481 = vmul.f32 %v428, %v480
        %v482 = vmul.f32 %v470, 3.8918573e-05
        %v483 = vadd.f32 %v482, 0.001143296
        %v484 = vmul.f32 %v470, %v483
        %v485 = vadd.f32 %v484, 0.014752088
        %v486 = vmul.f32 %v470, %v485
        %v487 = vadd.f32 %v486, 0.112945676
        %v488 = vmul.f32 %v470, %v487
        %v489 = vadd.f32 %v488, 0.4994258
        %v490 = vmul.f32 %v470, %v489
        %v491 = vadd.f32 %v490, 1.0
        %v492 = vrcp.pop %v491
        %v493 = vmul.f32 %v491, %v492
        %v494 = vsub.f32 1.0, %v493
        %v495 = vmul.f32 %v492, %v494
        %v496 = vadd.f32 %v492, %v495
        %vm497 = vweird.f32 %v491
        %vm498 = vweird.f32 %v492
        %vm499 = vmor %vm497, %vm498
        %v500 = vsel %vm499, %v492, %v496
        %v501 = vand.u32 2147483647, %v491
        %vm502 = vcmp.eq.f32.partialorder %v501, 8.507059e+37
        %v503 = vand.u32 %v491, 2147483648
        %v504 = vor.u32 1.1754944e-38, %v503
        %v505 = vsel %vm502, %v504, %v500
        %v506 = vmul.f32 %v481, %v505
        %v507 = vmin.f32 %v506, 1.0
        %v508 = vmax.f32 %v507, -1.0
        %v509 = vadd.f32 %v468, 1.0
        %v510 = vadd.f32 %v508, 1.0
        %v511 = vmul.f32 %v425, %v509
        %v512 = vmul.f32 %v426, %v510
        %513 = vrot.lane.b32.xlu0 %v511, 17
        %v514 = vpop.permute.xlu0 %513
        %515 = vrot.lane.b32.xlu0 %v512, 17
        %v516 = vpop.permute.xlu0 %515
        %v517 = vsel %vm270, %v514, %v516
        %v518 = vsel %vm270, %v516, %v514
        %519 = vrot.lane.b32.xlu0 %v511, 16
        %v520 = vpop.permute.xlu0 %519
        %521 = vrot.lane.b32.xlu0 %v512, 16
        %v522 = vpop.permute.xlu0 %521
        %v523 = vsel %vm277, %v520, %v522
        %v524 = vsel %vm277, %v522, %v520
        %525 = vrot.lane.b32.xlu0 %v511, 15
        %v526 = vpop.permute.xlu0 %525
        %527 = vrot.lane.b32.xlu0 %v512, 15
        %v528 = vpop.permute.xlu0 %527
        %v529 = vsel %vm284, %v526, %v528
        %v530 = vsel %vm284, %v528, %v526
        %531 = vrot.lane.b32.xlu0 %v511, 1
        %v532 = vpop.permute.xlu0 %531
        %533 = vrot.lane.b32.xlu0 %v512, 1
        %v534 = vpop.permute.xlu0 %533
        %v535 = vsel %vm291, %v532, %v534
        %v536 = vsel %vm291, %v534, %v532
        %537 = vrot.lane.b32.xlu0 %v511, 127
        %v538 = vpop.permute.xlu0 %537
        %539 = vrot.lane.b32.xlu0 %v512, 127
        %v540 = vpop.permute.xlu0 %539
        %v541 = vsel %vm298, %v538, %v540
        %v542 = vsel %vm298, %v540, %v538
        %543 = vrot.lane.b32.xlu0 %v511, 113
        %v544 = vpop.permute.xlu0 %543
        %545 = vrot.lane.b32.xlu0 %v512, 113
        %v546 = vpop.permute.xlu0 %545
        %v547 = vsel %vm305, %v544, %v546
        %v548 = vsel %vm305, %v546, %v544
        %549 = vrot.lane.b32.xlu0 %v511, 112
        %v550 = vpop.permute.xlu0 %549
        %551 = vrot.lane.b32.xlu0 %v512, 112
        %v552 = vpop.permute.xlu0 %551
        %v553 = vsel %vm312, %v550, %v552
        %v554 = vsel %vm312, %v552, %v550
        %555 = vrot.lane.b32.xlu0 %v511, 111
        %v556 = vpop.permute.xlu0 %555
        %557 = vrot.lane.b32.xlu0 %v512, 111
        %v558 = vpop.permute.xlu0 %557
        %v559 = vsel %vm319, %v556, %v558
        %v560 = vsel %vm319, %v558, %v556
        %v561 = vmul.f32 %v518, %v240
        %v562 = vmul.f32 %v517, %v241
        %v563 = vmul.f32 %v524, %v242
        %v564 = vmul.f32 %v523, %v243
        %v565 = vmul.f32 %v530, %v244
        %v566 = vmul.f32 %v529, %v245
        %v567 = vmul.f32 %v536, %v246
        %v568 = vmul.f32 %v535, %v247
        %v569 = vmul.f32 %v511, %v248
        %v570 = vmul.f32 %v512, %v249
        %v571 = vmul.f32 %v541, %v250
        %v572 = vmul.f32 %v542, %v251
        %v573 = vmul.f32 %v547, %v252
        %v574 = vmul.f32 %v548, %v253
        %v575 = vmul.f32 %v553, %v254
        %v576 = vmul.f32 %v554, %v255
        %v577 = vmul.f32 %v559, %v256
        %v578 = vmul.f32 %v560, %v257
        %v580 = vsel %vm340, %v259, 0
        %582 = vmatpush.msra.mxu0 0.0
        %583 = vmatpush.msra.mxu0 0.0
        %584 = vmatpush.msra.mxu0 0.0
        %585 = vmatpush.msra.mxu0 0.0
        %586 = vmatpush.msra.mxu0 0.0
        %587 = vmatpush.msra.mxu0 0.0
        %588 = vmatpush.msra.mxu0 0.0
        %589 = vmatpush.msra.mxu0 %v577
        %590 = vmatpush.msra.mxu0 %v575
        %591 = vmatpush.msra.mxu0 %v573
        %592 = vmatpush.msra.mxu0 %v571
        %593 = vmatpush.msra.mxu0 %v569
        %594 = vmatpush.msra.mxu0 %v567
        %595 = vmatpush.msra.mxu0 %v565
        %596 = vmatpush.msra.mxu0 %v563
        %597 = vmatpush.msra.mxu0 %v561
        %598 = vmatmul.f32.gmra.mxu0 %v580
        %v599 = vpop.f32.mrf.mxu0
        %v600 = vadd.f32 0.0, %v599
        %601 = vdwg.mxu0
        %602 = vmatpush.msra.mxu0 0.0
        %603 = vmatpush.msra.mxu0 0.0
        %604 = vmatpush.msra.mxu0 0.0
        %605 = vmatpush.msra.mxu0 0.0
        %606 = vmatpush.msra.mxu0 0.0
        %607 = vmatpush.msra.mxu0 0.0
        %608 = vmatpush.msra.mxu0 0.0
        %609 = vmatpush.msra.mxu0 %v578
        %610 = vmatpush.msra.mxu0 %v576
        %611 = vmatpush.msra.mxu0 %v574
        %612 = vmatpush.msra.mxu0 %v572
        %613 = vmatpush.msra.mxu0 %v570
        %614 = vmatpush.msra.mxu0 %v568
        %615 = vmatpush.msra.mxu0 %v566
        %616 = vmatpush.msra.mxu0 %v564
        %617 = vmatpush.msra.mxu0 %v562
        %618 = vmatmul.f32.gmra.mxu0 %v580
        %v619 = vpop.f32.mrf.mxu0
        %v620 = vadd.f32 0.0, %v619
        %621 = vdwg.mxu0
        %v622 = vadd.f32 %v600, %v620
        %623 = vadd.xlane.f32.xlu0 %v622
        %v624 = vpop.xlane.xlu0 %623
        %v625 = vmul.f32 %v600, %v600
        %v626 = vmul.f32 %v620, %v620
        %v627 = vadd.f32 %v625, %v626
        %628 = vadd.xlane.f32.xlu0 %v627
        %v629 = vpop.xlane.xlu0 %628
        %v630 = vmul.f32 %v624, 0.00390625
        %v631 = vmul.f32 %v629, 0.00390625
        %v632 = vmul.f32 %v630, %v630
        %v633 = vsub.f32 %v631, %v632
        %v634 = vmax.f32 %v633, 0.0
        %v635 = vadd.f32 %v634, 1e-05
        %v636 = vrsqrt.pop %v635
        %v637 = vmul.f32 %v636, %v635
        %v638 = vmul.f32 %v637, %v636
        %v639 = vmul.f32 0.5, %v638
        %v640 = vsub.f32 1.5, %v639
        %v641 = vmul.f32 %v636, %v640
        %vm642 = vweird.f32 %v635
        %vm643 = vweird.f32 %v636
        %vm644 = vmor %vm642, %vm643
        %v645 = vsel %vm644, %v636, %v641
        %v646 = vmul.f32 %v262, %v645
        %v647 = vmul.f32 %v630, %v646
        %v648 = vsub.f32 %v263, %v647
        %650 = vset.pattern.permute.xlu0 0
        %651 = vperm.xlu0 %650, %v646
        %v652 = vpop.permute.xlu0 %651
        %v654 = vmul.f32 %v600, %v652
        %v655 = vmul.f32 %v620, %v652
        %657 = vset.pattern.permute.xlu0 0
        %658 = vperm.xlu0 %657, %v648
        %v659 = vpop.permute.xlu0 %658
        %v661 = vadd.f32 %v654, %v659
        %v662 = vadd.f32 %v655, %v659
        %v663 = vadd.f32 %v661, %v238
        %v664 = vadd.f32 %v662, %v239
        %665 = vst [vmem:[%s224] sm:$0xff] %v663
        %666 = vst [vmem:[%s224 + $0x8] sm:$0xff] %v664
        %s667 = sand.u32 %s121, 1
        %s668 = scalar_lea.sflag [#allocation4], %s667
        %s669 = sand.u32 %s121, 1
        %s670 = smul.addr %s669, 16
        %s671 = scalar_lea.vmem [#allocation5], %s670
        // Predicated region
        $region41: #{tpu_custom_call.1} parent=35 // pred_check
          %p672 = pneg %p131
        $region42: #{tpu_custom_call.1} parent=35 // pred_check_branch
          %674 = sbr.rel (%p672) target = $region44
        $region43: #{tpu_custom_call.1} parent=35 // pred_region
          %s675 = smul.u32 2, %s19
          %677 = vsyncadd %s668, 0
          %s678 = smul.addr %s675, 8
          %s679 = scalar_lea.hbm %s4, %s678
          %s681 = sshll.u32 %s671, 4
          %s682 = int_to_ptr.vmem [resolvable:$true] %s681
          %s683 = sshll.u32 %s679, 4
          %s684 = int_to_ptr.hbm [resolvable:$true] %s683
          %686 = dma.vmem_to_hbm [thread:$0]  %s682, 256, %s684, %s668
        $region44: #{tpu_custom_call.1} parent=35 // pred_fallthru
          _
      $region36: #{tpu_custom_call.1} parent=5 // pred_fallthru
        _
      %p687 = scmp.le.s32.totalorder 2, %s14
      // Predicated region
      $region45: #{tpu_custom_call.1} parent=5 // pred_check
        %p688 = pneg %p687
      $region46: #{tpu_custom_call.1} parent=5 // pred_check_branch
        %690 = sbr.rel (%p688) target = $region48
      $region47: #{tpu_custom_call.1} parent=5 // pred_region
        %s691 = ssub.s32 %s14, 2
        // Predicated region
        $region49: #{tpu_custom_call.1} parent=47 // pred_check
          %p692 = pneg %p137
        $region50: #{tpu_custom_call.1} parent=47 // pred_check_branch
          %694 = sbr.rel (%p692) target = $region52
        $region51: #{tpu_custom_call.1} parent=47 // pred_region
          %s695 = sand.u32 %s122, 1
          %s696 = scalar_lea.sflag [#allocation4], %s695
          %s697 = sand.u32 %s122, 1
          %s698 = smul.addr %s697, 16
          %s699 = scalar_lea.vmem [#allocation5], %s698
          %701 = dma.done %s696, 256
        $region52: #{tpu_custom_call.1} parent=47 // pred_fallthru
          _
      $region48: #{tpu_custom_call.1} parent=5 // pred_fallthru
        _
    $region6: #{tpu_custom_call.1} parent=1 // loop_footer
      %s18 = sadd.s32 1, %s14
    $region7: #{tpu_custom_call.1} parent=1 // loop_footer_branch
      %13 = sbr.rel target = $region3
    $region8: #{tpu_custom_call.1} parent=1 // loop_exit
      _
    %702 = vsyncpa [#allocation3], 1
    %s703 = scalar_lea.sflag [#allocation3], 1
    %704 = vsyncpa %s703, 1
    %705 = vsyncpa [#allocation4], 1
    %s706 = scalar_lea.sflag [#allocation4], 1
    %707 = vsyncpa %s706, 1

</llo_original>
